<compile_context>
chip_gen: v7x
topology: tpu7x:2x2x1
jax: 0.10.0
libtpu: 0.0.40
codegen_flags: <defaults>
</compile_context>

<pallas_src>
import jax
import jax.numpy as jnp
from jax.experimental import pallas as pl
from jax.experimental.pallas import tpu as pltpu

NUM_EXPERTS = 3
NUM_CLASSES = 256


def ensemble_kernel(x_ref, mask_ref, w_ref, b_ref, out_ref):
    # x_ref:    (Bb, S, H) VMEM  batch block of sequence features
    # mask_ref: (Bb, S, 1) VMEM  validity mask (S on the sublane axis)
    # w_ref:    (H, C)     VMEM  pre-combined classifier weight sum_e fc_w[e]*W_e
    # b_ref:    (1, C)     VMEM  pre-combined bias sum_e fc_w[e]*b_e + fc_b
    # out_ref:  (Bb, C)    VMEM  class scores (lane-dense, C = 256)
    x = x_ref[...].astype(jnp.float32)
    m = mask_ref[...].astype(jnp.float32)

    # Masked mean pooling over the sequence axis (synthetic expert backbone).
    # m is (Bb, S, 1) so the multiply is a lane splat; reduce over S is a
    # sublane reduce.  The divide is exact and only over a (Bb, 1) column.
    pooled_sum = jnp.sum(x * m, axis=1)                      # (Bb, H)
    count = jnp.maximum(jnp.sum(m, axis=1), 1.0)             # (Bb, 1)
    pooled = pooled_sum * (1.0 / count)                      # (Bb, H)

    # Single MXU matmul; bias already includes nn.Linear(E, 1).bias.
    out_ref[...] = (
        jnp.dot(pooled, w_ref[...], preferred_element_type=jnp.float32)
        + b_ref[...]
    )
    # TODO(synk): nn.Dropout(p=0.2) is identity in eval(); training-mode
    # dropout (pltpu.prng_* based masking on y) is intentionally not implemented.


def _choose_block_b(B):
    """cdiv-based batch blocking.

    * batch is padded to a multiple of 8 (sublane legality), then to a
      multiple of the chosen block;
    * blocks of up to 512 rows (big tiles ~ HBM roofline, amortize per-step
      overhead);
    * when B >= 16, cap the block at ceil(B/2) rounded to 8 so the grid has
      >= 2 steps and the "parallel" batch axis can shard across both v7x
      TensorCores; the extra step is noise on single-TC v5e/v6e.
    """
    b8 = max(8, pl.cdiv(B, 8) * 8)
    if b8 < 16:
        return b8
    half = pl.cdiv(b8 // 2, 8) * 8
    return min(512, b8, half)


def ensemble_forward(x, mask, w, b, fc_w, fc_b):
    B, S, H = x.shape
    E, _, C = w.shape

    # Exact linear fold of the E expert classifiers and Linear(E, 1):
    # weights-only and batch-independent, so computed once here instead of
    # re-running every grid step inside the kernel.
    w_comb = jnp.einsum("e,ehc->hc", fc_w[0], w)                          # (H, C)
    b_comb = (jnp.einsum("e,ec->c", fc_w[0], b) + fc_b[0, 0]).reshape(1, C)

    # Mask with S on the sublane axis -> cheap lane-splat broadcast in-kernel.
    mask3 = mask.astype(jnp.float32).reshape(B, S, 1)

    block_b = _choose_block_b(B)
    grid_b = pl.cdiv(B, block_b)
    b_pad = grid_b * block_b
    if b_pad != B:
        pad = ((0, b_pad - B), (0, 0), (0, 0))
        x = jnp.pad(x, pad)            # zero rows -> count clamps to 1, out sliced off
        mask3 = jnp.pad(mask3, pad)

    out = pl.pallas_call(
        ensemble_kernel,
        out_shape=jax.ShapeDtypeStruct((b_pad, C), jnp.float32),
        grid=(grid_b,),
        in_specs=[
            # Batch-blocked activations: double-buffered HBM->VMEM per step.
            pl.BlockSpec((block_b, S, H), lambda i: (i, 0, 0)),   # x
            pl.BlockSpec((block_b, S, 1), lambda i: (i, 0, 0)),   # mask
            # Pre-combined weights: constant block index -> fetched once,
            # VMEM-resident across all grid steps (~33 KB).
            pl.BlockSpec((H, C), lambda i: (0, 0)),               # w_comb
            pl.BlockSpec((1, C), lambda i: (0, 0)),               # b_comb
        ],
        out_specs=pl.BlockSpec((block_b, C), lambda i: (i, 0)),
        compiler_params=pltpu.CompilerParams(
            dimension_semantics=("parallel",),        # shard batch over TCs
            vmem_limit_bytes=32 * 1024 * 1024,        # explicit, v7x-safe
        ),
    )(x, mask3, w_comb, b_comb)
    return out[:B]


def ensemble_reference(x, mask, w, b, fc_w, fc_b):
    m = mask.astype(jnp.float32)
    pooled = jnp.sum(x * m[:, :, None], axis=1) / jnp.maximum(
        jnp.sum(m, axis=1, keepdims=True), 1.0
    )
    y = jnp.einsum("bh,ehc->bce", pooled, w) + jnp.transpose(b)[None]  # (B, C, E)
    return jnp.einsum("bce,e->bc", y, fc_w[0]) + fc_b[0, 0]


def _make_inputs(key, B, S, H, E, C):
    k1, k2, k3, k4, k5 = jax.random.split(key, 5)
    x = jax.random.normal(k1, (B, S, H), dtype=jnp.float32)
    mask = (jax.random.uniform(k2, (B, S)) > 0.3).astype(jnp.float32)
    # Deterministic synthetic parameters (no checkpoint loading).
    w = 0.05 * jax.random.normal(k3, (E, H, C), dtype=jnp.float32)
    b = 0.01 * jax.random.normal(k4, (E, C), dtype=jnp.float32)
    fc_w = jax.random.normal(k5, (1, E), dtype=jnp.float32)  # nn.Linear(E,1).weight
    fc_b = jnp.zeros((1, 1), dtype=jnp.float32)              # nn.Linear(E,1).bias
    return x, mask, w, b, fc_w, fc_b


if __name__ == "__main__":
    key = jax.random.PRNGKey(0)
    E, C = NUM_EXPERTS, NUM_CLASSES

    # Primary small-shape check (matches the module's eval-time usage).
    B, S, H = 2, 8, 32
    x, mask, w, b, fc_w, fc_b = _make_inputs(key, B, S, H, E, C)
    out = ensemble_forward(x, mask, w, b, fc_w, fc_b)
    jax.block_until_ready(out)
    ref = ensemble_reference(x, mask, w, b, fc_w, fc_b)
    assert out.shape == (B, C)
    # Divide is exact now; remaining slack covers MXU / XLA default matmul
    # precision differences between the fused and the per-expert reference path.
    assert jnp.allclose(out, ref, atol=2e-3, rtol=2e-3)

    # Secondary check: ragged batch -> cdiv blocking, padding, 2-step
    # "parallel" grid (exercises the multi-TensorCore path on v7x).
    B2 = 200  # -> block_b = 104, grid = (2,), padded to 208 rows
    x2, mask2, w2, b2, fc_w2, fc_b2 = _make_inputs(
        jax.random.PRNGKey(1), B2, S, H, E, C
    )
    out2 = ensemble_forward(x2, mask2, w2, b2, fc_w2, fc_b2)
    jax.block_until_ready(out2)
    ref2 = ensemble_reference(x2, mask2, w2, b2, fc_w2, fc_b2)
    assert out2.shape == (B2, C)
    assert jnp.allclose(out2, ref2, atol=2e-3, rtol=2e-3)

    print("KERNEL_OK")
</pallas_src>

<mosaic_0001>
module attributes {stable_mosaic.version = 11 : i64} {
  func.func @ensemble_kernel(%arg0: i32, %arg1: memref<8x8x32xf32, #tpu.memory_space<vmem>>, %arg2: memref<8x8x1xf32, #tpu.memory_space<vmem>>, %arg3: memref<32x256xf32, #tpu.memory_space<vmem>>, %arg4: memref<1x256xf32, #tpu.memory_space<vmem>>, %arg5: memref<8x256xf32, #tpu.memory_space<vmem>>) attributes {dimension_semantics = [#tpu.dimension_semantics<parallel>], iteration_bounds = array<i64: 1>, scalar_prefetch = 0 : i64, scratch_operands = 0 : i64, tpu.core_type = #tpu.core_type<tc>, window_params = [{transform_indices = @transform_0, window_bounds = array<i64: 8, 8, 32>}, {transform_indices = @transform_1, window_bounds = array<i64: 8, 8, 1>}, {pipeline_mode = #tpu.pipeline_mode<synchronous>, transform_indices = @transform_2, window_bounds = array<i64: 32, 256>}, {pipeline_mode = #tpu.pipeline_mode<synchronous>, transform_indices = @transform_3, window_bounds = array<i64: 1, 256>}, {transform_indices = @transform_4, window_bounds = array<i64: 8, 256>}]} {
    %c0 = arith.constant 0 : index
    %c0_0 = arith.constant 0 : index
    %c0_1 = arith.constant 0 : index
    %0 = vector.load %arg1[%c0, %c0_0, %c0_1] : memref<8x8x32xf32, #tpu.memory_space<vmem>>, vector<8x8x32xf32>
    %c0_2 = arith.constant 0 : index
    %c0_3 = arith.constant 0 : index
    %c0_4 = arith.constant 0 : index
    %1 = vector.load %arg2[%c0_2, %c0_3, %c0_4] : memref<8x8x1xf32, #tpu.memory_space<vmem>>, vector<8x8x1xf32>
    %2 = vector.broadcast %1 : vector<8x8x1xf32> to vector<8x8x32xf32>
    %3 = arith.mulf %0, %2 : vector<8x8x32xf32>
    %cst = arith.constant dense<0.000000e+00> : vector<8x32xf32>
    %4 = vector.multi_reduction <add>, %3, %cst [1] : vector<8x8x32xf32> to vector<8x32xf32>
    %cst_5 = arith.constant dense<0.000000e+00> : vector<8x1xf32>
    %5 = vector.multi_reduction <add>, %1, %cst_5 [1] : vector<8x8x1xf32> to vector<8x1xf32>
    %cst_6 = arith.constant 1.000000e+00 : f32
    %6 = vector.broadcast %cst_6 : f32 to vector<8x1xf32>
    %7 = arith.maximumf %5, %6 : vector<8x1xf32>
    %cst_7 = arith.constant 1.000000e+00 : f32
    %8 = vector.broadcast %cst_7 : f32 to vector<8x1xf32>
    %9 = arith.divf %8, %7 : vector<8x1xf32>
    %10 = vector.broadcast %9 : vector<8x1xf32> to vector<8x32xf32>
    %11 = arith.mulf %4, %10 : vector<8x32xf32>
    %c0_8 = arith.constant 0 : index
    %c0_9 = arith.constant 0 : index
    %12 = vector.load %arg3[%c0_8, %c0_9] : memref<32x256xf32, #tpu.memory_space<vmem>>, vector<32x256xf32>
    %cst_10 = arith.constant dense<0.000000e+00> : vector<8x256xf32>
    %13 = tpu.matmul %11, %12, %cst_10 {dimension_numbers = #tpu.dot_dimension_numbers<[1], [0], [0], [1], [0, 0, 1, 1], [], []>} : vector<8x32xf32>, vector<32x256xf32>, vector<8x256xf32> -> vector<8x256xf32>
    %c0_11 = arith.constant 0 : index
    %c0_12 = arith.constant 0 : index
    %14 = vector.load %arg4[%c0_11, %c0_12] : memref<1x256xf32, #tpu.memory_space<vmem>>, vector<1x256xf32>
    %15 = vector.broadcast %14 : vector<1x256xf32> to vector<8x256xf32>
    %16 = arith.addf %13, %15 : vector<8x256xf32>
    %c0_13 = arith.constant 0 : index
    %c0_14 = arith.constant 0 : index
    %17 = vector.load %arg5[%c0_13, %c0_14] : memref<8x256xf32, #tpu.memory_space<vmem>>, vector<8x256xf32>
    tpu.vector_store %arg5[%c0_13, %c0_14], %16 {strides = array<i32>} : memref<8x256xf32, #tpu.memory_space<vmem>>, vector<8x256xf32>,
    return
  }
  func.func @transform_0(%arg0: i32) -> (i32, i32, i32) {
    %c0_i32 = arith.constant 0 : i32
    %c0_i32_0 = arith.constant 0 : i32
    %c0_i32_1 = arith.constant 0 : i32
    return %arg0, %c0_i32, %c0_i32_0 : i32, i32, i32
  }
  func.func @transform_1(%arg0: i32) -> (i32, i32, i32) {
    %c0_i32 = arith.constant 0 : i32
    %c0_i32_0 = arith.constant 0 : i32
    %c0_i32_1 = arith.constant 0 : i32
    return %arg0, %c0_i32, %c0_i32_0 : i32, i32, i32
  }
  func.func @transform_2(%arg0: i32) -> (i32, i32) {
    %c0_i32 = arith.constant 0 : i32
    %c0_i32_0 = arith.constant 0 : i32
    %c0_i32_1 = arith.constant 0 : i32
    return %c0_i32, %c0_i32_0 : i32, i32
  }
  func.func @transform_3(%arg0: i32) -> (i32, i32) {
    %c0_i32 = arith.constant 0 : i32
    %c0_i32_0 = arith.constant 0 : i32
    %c0_i32_1 = arith.constant 0 : i32
    return %c0_i32, %c0_i32_0 : i32, i32
  }
  func.func @transform_4(%arg0: i32) -> (i32, i32) {
    %c0_i32 = arith.constant 0 : i32
    %c0_i32_0 = arith.constant 0 : i32
    return %arg0, %c0_i32 : i32, i32
  }
}

</mosaic_0001>

<llo_original>
// kernel: tpu_custom_call.1
$region0: #{tpu_custom_call.1}
  #allocation0 [shape = 'u32[]', space=smem, size = 0x4, offset = 0x4, fixed_abs, tag = 'smem constant byte address 0x4 - core index']
  #allocation1 [shape = 'u32[144,128]{1,0:T(1,128)}', space=vmem, size = 0x12000, scoped, tag = 'internal scratch']
  %s0 = inlined_call_operand.vmem [shape: f32[8,8,32], index: 0, kind: input, shape index: {}]
  %s1 = inlined_call_operand.vmem [shape: f32[8,8,1], index: 1, kind: input, shape index: {}]
  %s2 = inlined_call_operand.hbm [shape: f32[32,256], index: 2, kind: input, shape index: {}]
  %s3 = inlined_call_operand.vmem [shape: f32[1,256], index: 3, kind: input, shape index: {}]
  %s4 = inlined_call_operand.hbm [shape: f32[8,256], index: 4, kind: output, shape index: {}]
  %s5 = sld [smem:[#allocation0]]
  $region30: #{tpu_custom_call.1} parent=0
    _
  %s7 = ssub.s32 1, %s5
  %s8 = scalar_select 0, %s7, %s5
  $region1: #{tpu_custom_call.1} parent=0
    #allocation2 [shape = 'u8[32768]{0}', space=vmem, size = 0x8000, scoped, tag = 'input window, operand 2, single buffered']
    #allocation3 [shape = 's32[1]{0}', space=sflag, size = 0x4, scoped, tag = 'scoped memory for tpu_custom_call.1']
    #allocation4 [shape = 's32[1]{0}', space=sflag, size = 0x4, scoped, tag = 'scoped memory for tpu_custom_call.1']
    #allocation5 [shape = 'u8[8192]{0}', space=vmem, size = 0x2000, scoped, tag = 'output window, operand 0, single buffered']
    %9 = vsyncpa [#allocation3], 0
    %10 = vsyncpa [#allocation4], 0
    // Predicated region
    $region2: #{tpu_custom_call.1} parent=1 // pred_check
      _
    $region3: #{tpu_custom_call.1} parent=1 // pred_check_branch
      %12 = sbr.rel (0) target = $region5
    $region4: #{tpu_custom_call.1} parent=1 // pred_region
      _
    $region5: #{tpu_custom_call.1} parent=1 // pred_fallthru
      _
    // Predicated region
    $region6: #{tpu_custom_call.1} parent=1 // pred_check
      _
    $region7: #{tpu_custom_call.1} parent=1 // pred_check_branch
      %14 = sbr.rel (0) target = $region9
    $region8: #{tpu_custom_call.1} parent=1 // pred_region
      _
    $region9: #{tpu_custom_call.1} parent=1 // pred_fallthru
      _
    // Predicated region
    $region10: #{tpu_custom_call.1} parent=1 // pred_check
      _
    $region11: #{tpu_custom_call.1} parent=1 // pred_check_branch
      %16 = sbr.rel (0) target = $region13
    $region12: #{tpu_custom_call.1} parent=1 // pred_region
      %s18 = ssub.s32 1024, 1024
      %19 = vsyncadd [#allocation3], %s18
      %s20 = sshll.u32 [#allocation2], 4
      %s21 = int_to_ptr.vmem [resolvable:$true] %s20
      %26 = dma.hbm_to_vmem [thread:$0]  %s2, 1024, %s21, [#allocation3], 256, 256, 16
    $region13: #{tpu_custom_call.1} parent=1 // pred_fallthru
      _
    // Predicated region
    $region14: #{tpu_custom_call.1} parent=1 // pred_check
      _
    $region15: #{tpu_custom_call.1} parent=1 // pred_check_branch
      %28 = sbr.rel (0) target = $region17
    $region16: #{tpu_custom_call.1} parent=1 // pred_region
      _
    $region17: #{tpu_custom_call.1} parent=1 // pred_fallthru
      _
    // Predicated region
    $region18: #{tpu_custom_call.1} parent=1 // pred_check
      _
    $region19: #{tpu_custom_call.1} parent=1 // pred_check_branch
      %30 = sbr.rel (0) target = $region21
    $region20: #{tpu_custom_call.1} parent=1 // pred_region
      %31 = dma.done [#allocation3], 1024
    $region21: #{tpu_custom_call.1} parent=1 // pred_fallthru
      _
    %v32 = vld [vmem:[%s0] sm:$0xff]
    %v33 = vld [vmem:[%s0 + $0x8] sm:$0xff]
    %v34 = vld [vmem:[%s0 + $0x10] sm:$0xff]
    %v35 = vld [vmem:[%s0 + $0x18] sm:$0xff]
    %v36 = vld [vmem:[%s0 + $0x20] sm:$0xff]
    %v37 = vld [vmem:[%s0 + $0x28] sm:$0xff]
    %v38 = vld [vmem:[%s0 + $0x30] sm:$0xff]
    %v39 = vld [vmem:[%s0 + $0x38] sm:$0xff]
    %v40 = vld [vmem:[%s1] sm:$0xff]
    %v41 = vld [vmem:[%s1 + $0x8] sm:$0xff]
    %v42 = vld [vmem:[%s1 + $0x10] sm:$0xff]
    %v43 = vld [vmem:[%s1 + $0x18] sm:$0xff]
    %v44 = vld [vmem:[%s1 + $0x20] sm:$0xff]
    %v45 = vld [vmem:[%s1 + $0x28] sm:$0xff]
    %v46 = vld [vmem:[%s1 + $0x30] sm:$0xff]
    %v47 = vld [vmem:[%s1 + $0x38] sm:$0xff]
    %49 = vset.pattern.permute.xlu0 0
    %50 = vperm.xlu0 %49, %v40
    %v51 = vpop.permute.xlu0 %50
    %54 = vset.pattern.permute.xlu0 0
    %55 = vperm.xlu0 %54, %v41
    %v56 = vpop.permute.xlu0 %55
    %59 = vset.pattern.permute.xlu0 0
    %60 = vperm.xlu0 %59, %v42
    %v61 = vpop.permute.xlu0 %60
    %64 = vset.pattern.permute.xlu0 0
    %65 = vperm.xlu0 %64, %v43
    %v66 = vpop.permute.xlu0 %65
    %69 = vset.pattern.permute.xlu0 0
    %70 = vperm.xlu0 %69, %v44
    %v71 = vpop.permute.xlu0 %70
    %74 = vset.pattern.permute.xlu0 0
    %75 = vperm.xlu0 %74, %v45
    %v76 = vpop.permute.xlu0 %75
    %79 = vset.pattern.permute.xlu0 0
    %80 = vperm.xlu0 %79, %v46
    %v81 = vpop.permute.xlu0 %80
    %84 = vset.pattern.permute.xlu0 0
    %85 = vperm.xlu0 %84, %v47
    %v86 = vpop.permute.xlu0 %85
    %v88 = vmul.f32 %v32, %v51
    %v89 = vmul.f32 %v33, %v56
    %v90 = vmul.f32 %v34, %v61
    %v91 = vmul.f32 %v35, %v66
    %v92 = vmul.f32 %v36, %v71
    %v93 = vmul.f32 %v37, %v76
    %v94 = vmul.f32 %v38, %v81
    %v95 = vmul.f32 %v39, %v86
    %vm96 = vcmask 261120
    %v97 = vsel %vm96, %v88, 0.0
    %v98 = vrot.slane %v97, 4
    %v99 = vadd.f32 %v97, %v98
    %v100 = vrot.slane %v99, 2
    %v101 = vadd.f32 %v99, %v100
    %v102 = vrot.slane %v101, 1
    %v103 = vadd.f32 %v101, %v102
    %v104 = vsel %vm96, %v89, 0.0
    %v105 = vrot.slane %v104, 4
    %v106 = vadd.f32 %v104, %v105
    %v107 = vrot.slane %v106, 2
    %v108 = vadd.f32 %v106, %v107
    %v109 = vrot.slane %v108, 1
    %v110 = vadd.f32 %v108, %v109
    %v111 = vsel %vm96, %v90, 0.0
    %v112 = vrot.slane %v111, 4
    %v113 = vadd.f32 %v111, %v112
    %v114 = vrot.slane %v113, 2
    %v115 = vadd.f32 %v113, %v114
    %v116 = vrot.slane %v115, 1
    %v117 = vadd.f32 %v115, %v116
    %v118 = vsel %vm96, %v91, 0.0
    %v119 = vrot.slane %v118, 4
    %v120 = vadd.f32 %v118, %v119
    %v121 = vrot.slane %v120, 2
    %v122 = vadd.f32 %v120, %v121
    %v123 = vrot.slane %v122, 1
    %v124 = vadd.f32 %v122, %v123
    %v125 = vsel %vm96, %v92, 0.0
    %v126 = vrot.slane %v125, 4
    %v127 = vadd.f32 %v125, %v126
    %v128 = vrot.slane %v127, 2
    %v129 = vadd.f32 %v127, %v128
    %v130 = vrot.slane %v129, 1
    %v131 = vadd.f32 %v129, %v130
    %v132 = vsel %vm96, %v93, 0.0
    %v133 = vrot.slane %v132, 4
    %v134 = vadd.f32 %v132, %v133
    %v135 = vrot.slane %v134, 2
    %v136 = vadd.f32 %v134, %v135
    %v137 = vrot.slane %v136, 1
    %v138 = vadd.f32 %v136, %v137
    %v139 = vsel %vm96, %v94, 0.0
    %v140 = vrot.slane %v139, 4
    %v141 = vadd.f32 %v139, %v140
    %v142 = vrot.slane %v141, 2
    %v143 = vadd.f32 %v141, %v142
    %v144 = vrot.slane %v143, 1
    %v145 = vadd.f32 %v143, %v144
    %v146 = vsel %vm96, %v95, 0.0
    %v147 = vrot.slane %v146, 4
    %v148 = vadd.f32 %v146, %v147
    %v149 = vrot.slane %v148, 2
    %v150 = vadd.f32 %v148, %v149
    %v151 = vrot.slane %v150, 1
    %v152 = vadd.f32 %v150, %v151
    %vm153 = vcmask 7168
    %v154 = vsel %vm153, %v40, 0.0
    %v155 = vrot.slane %v154, 4
    %v156 = vadd.f32 %v154, %v155
    %v157 = vrot.slane %v156, 2
    %v158 = vadd.f32 %v156, %v157
    %v159 = vrot.slane %v158, 1
    %v160 = vadd.f32 %v158, %v159
    %v161 = vsel %vm153, %v41, 0.0
    %v162 = vrot.slane %v161, 4
    %v163 = vadd.f32 %v161, %v162
    %v164 = vrot.slane %v163, 2
    %v165 = vadd.f32 %v163, %v164
    %v166 = vrot.slane %v165, 1
    %v167 = vadd.f32 %v165, %v166
    %v168 = vsel %vm153, %v42, 0.0
    %v169 = vrot.slane %v168, 4
    %v170 = vadd.f32 %v168, %v169
    %v171 = vrot.slane %v170, 2
    %v172 = vadd.f32 %v170, %v171
    %v173 = vrot.slane %v172, 1
    %v174 = vadd.f32 %v172, %v173
    %v175 = vsel %vm153, %v43, 0.0
    %v176 = vrot.slane %v175, 4
    %v177 = vadd.f32 %v175, %v176
    %v178 = vrot.slane %v177, 2
    %v179 = vadd.f32 %v177, %v178
    %v180 = vrot.slane %v179, 1
    %v181 = vadd.f32 %v179, %v180
    %v182 = vsel %vm153, %v44, 0.0
    %v183 = vrot.slane %v182, 4
    %v184 = vadd.f32 %v182, %v183
    %v185 = vrot.slane %v184, 2
    %v186 = vadd.f32 %v184, %v185
    %v187 = vrot.slane %v186, 1
    %v188 = vadd.f32 %v186, %v187
    %v189 = vsel %vm153, %v45, 0.0
    %v190 = vrot.slane %v189, 4
    %v191 = vadd.f32 %v189, %v190
    %v192 = vrot.slane %v191, 2
    %v193 = vadd.f32 %v191, %v192
    %v194 = vrot.slane %v193, 1
    %v195 = vadd.f32 %v193, %v194
    %v196 = vsel %vm153, %v46, 0.0
    %v197 = vrot.slane %v196, 4
    %v198 = vadd.f32 %v196, %v197
    %v199 = vrot.slane %v198, 2
    %v200 = vadd.f32 %v198, %v199
    %v201 = vrot.slane %v200, 1
    %v202 = vadd.f32 %v200, %v201
    %v203 = vsel %vm153, %v47, 0.0
    %v204 = vrot.slane %v203, 4
    %v205 = vadd.f32 %v203, %v204
    %v206 = vrot.slane %v205, 2
    %v207 = vadd.f32 %v205, %v206
    %v208 = vrot.slane %v207, 1
    %v209 = vadd.f32 %v207, %v208
    %v210 = vmax.f32 %v160, 1.0
    %v211 = vmax.f32 %v167, 1.0
    %v212 = vmax.f32 %v174, 1.0
    %v213 = vmax.f32 %v181, 1.0
    %v214 = vmax.f32 %v188, 1.0
    %v215 = vmax.f32 %v195, 1.0
    %v216 = vmax.f32 %v202, 1.0
    %v217 = vmax.f32 %v209, 1.0
    %v218 = vrcp.pop %v210
    %v219 = vmul.f32 1.0, %v218
    %v220 = vrcp.pop %v211
    %v221 = vmul.f32 1.0, %v220
    %v222 = vrcp.pop %v212
    %v223 = vmul.f32 1.0, %v222
    %v224 = vrcp.pop %v213
    %v225 = vmul.f32 1.0, %v224
    %v226 = vrcp.pop %v214
    %v227 = vmul.f32 1.0, %v226
    %v228 = vrcp.pop %v215
    %v229 = vmul.f32 1.0, %v228
    %v230 = vrcp.pop %v216
    %v231 = vmul.f32 1.0, %v230
    %v232 = vrcp.pop %v217
    %v233 = vmul.f32 1.0, %v232
    %235 = vset.pattern.permute.xlu0 0
    %236 = vperm.xlu0 %235, %v219
    %v237 = vpop.permute.xlu0 %236
    %240 = vset.pattern.permute.xlu0 0
    %241 = vperm.xlu0 %240, %v221
    %v242 = vpop.permute.xlu0 %241
    %245 = vset.pattern.permute.xlu0 0
    %246 = vperm.xlu0 %245, %v223
    %v247 = vpop.permute.xlu0 %246
    %250 = vset.pattern.permute.xlu0 0
    %251 = vperm.xlu0 %250, %v225
    %v252 = vpop.permute.xlu0 %251
    %255 = vset.pattern.permute.xlu0 0
    %256 = vperm.xlu0 %255, %v227
    %v257 = vpop.permute.xlu0 %256
    %260 = vset.pattern.permute.xlu0 0
    %261 = vperm.xlu0 %260, %v229
    %v262 = vpop.permute.xlu0 %261
    %265 = vset.pattern.permute.xlu0 0
    %266 = vperm.xlu0 %265, %v231
    %v267 = vpop.permute.xlu0 %266
    %270 = vset.pattern.permute.xlu0 0
    %271 = vperm.xlu0 %270, %v233
    %v272 = vpop.permute.xlu0 %271
    %v274 = vmul.f32 %v103, %v237
    %v275 = vmul.f32 %v110, %v242
    %v276 = vmul.f32 %v117, %v247
    %v277 = vmul.f32 %v124, %v252
    %v278 = vmul.f32 %v131, %v257
    %v279 = vmul.f32 %v138, %v262
    %v280 = vmul.f32 %v145, %v267
    %v281 = vmul.f32 %v152, %v272
    %v282 = vld [vmem:[#allocation2] sm:$0xff]
    %v283 = vld [vmem:[#allocation2 + $0x8] sm:$0xff]
    %v284 = vld [vmem:[#allocation2 + $0x10] sm:$0xff]
    %v285 = vld [vmem:[#allocation2 + $0x18] sm:$0xff]
    %v286 = vld [vmem:[#allocation2 + $0x20] sm:$0xff]
    %v287 = vld [vmem:[#allocation2 + $0x28] sm:$0xff]
    %v288 = vld [vmem:[#allocation2 + $0x30] sm:$0xff]
    %v289 = vld [vmem:[#allocation2 + $0x38] sm:$0xff]
    %v290 = vld [vmem:[%s3] sm:$0x3]
    %v292 = vlaneseq
    %v293 = vshrl.u32 %v292, 7
    %v294 = vsub.s32 0, %v293
    %v295 = vrot.slane %v290, %v294
    %v296 = vlaneseq
    %v297 = vshrl.u32 %v296, 7
    %v298 = vsub.s32 1, %v297
    %v299 = vrot.slane %v290, %v298
    %vm310 = vcmask 1041409
    %v311 = vsel %vm310, %v275, %v274
    %vm312 = vcmask 1042434
    %v313 = vsel %vm312, %v276, %v311
    %vm314 = vcmask 1043459
    %v315 = vsel %vm314, %v277, %v313
    %vm316 = vcmask 1044484
    %v317 = vsel %vm316, %v278, %v315
    %vm318 = vcmask 1045509
    %v319 = vsel %vm318, %v279, %v317
    %vm320 = vcmask 1046534
    %v321 = vsel %vm320, %v280, %v319
    %vm322 = vcmask 1047559
    %v323 = vsel %vm322, %v281, %v321
    %v324 = vsel %vm96, %v323, 0
    %326 = vmatprep.subr.mxu0 %v283
    %327 = vmatpush1.msra.mxu0 %v282
    %328 = vmatprep.subr.mxu0 %v285
    %329 = vmatpush1.msra.mxu0 %v284
    %330 = vmatprep.subr.mxu0 %v287
    %331 = vmatpush1.msra.mxu0 %v286
    %332 = vmatprep.subr.mxu0 %v289
    %333 = vmatpush1.msra.mxu0 %v288
    %334 = vmatprep.subr.mxu0 0.0
    %335 = vmatpush1.msra.mxu0 0.0
    %336 = vmatprep.subr.mxu0 0.0
    %337 = vmatpush1.msra.mxu0 0.0
    %338 = vmatprep.subr.mxu0 0.0
    %339 = vmatpush1.msra.mxu0 0.0
    %340 = vmatprep.subr.mxu0 0.0
    %341 = vmatpush1.msra.mxu0 0.0
    %342 = vmatprep.subr.mxu0 0.0
    %343 = vmatpush1.msra.mxu0 0.0
    %344 = vmatprep.subr.mxu0 0.0
    %345 = vmatpush1.msra.mxu0 0.0
    %346 = vmatprep.subr.mxu0 0.0
    %347 = vmatpush1.msra.mxu0 0.0
    %348 = vmatprep.subr.mxu0 0.0
    %349 = vmatpush1.msra.mxu0 0.0
    %350 = vmatprep.subr.mxu0 0.0
    %351 = vmatpush1.msra.mxu0 0.0
    %352 = vmatprep.subr.mxu0 0.0
    %353 = vmatpush1.msra.mxu0 0.0
    %354 = vmatprep.subr.mxu0 0.0
    %355 = vmatpush1.msra.mxu0 0.0
    %356 = vmatprep.subr.mxu0 0.0
    %357 = vmatpush1.msra.mxu0 0.0
    %358 = vmatprep.subr.mxu0 0.0
    %359 = vmatpush1.msra.mxu0 0.0
    %360 = vmatprep.subr.mxu0 0.0
    %361 = vmatpush1.msra.mxu0 0.0
    %362 = vmatprep.subr.mxu0 0.0
    %363 = vmatpush1.msra.mxu0 0.0
    %364 = vmatprep.subr.mxu0 0.0
    %365 = vmatpush1.msra.mxu0 0.0
    %366 = vmatprep.subr.mxu0 0.0
    %367 = vmatpush1.msra.mxu0 0.0
    %368 = vmatprep.subr.mxu0 0.0
    %369 = vmatpush1.msra.mxu0 0.0
    %370 = vmatprep.subr.mxu0 0.0
    %371 = vmatpush1.msra.mxu0 0.0
    %372 = vmatprep.subr.mxu0 0.0
    %373 = vmatpush1.msra.mxu0 0.0
    %374 = vmatprep.subr.mxu0 0.0
    %375 = vmatpush1.msra.mxu0 0.0
    %376 = vmatprep.subr.mxu0 0.0
    %377 = vmatpush1.msra.mxu0 0.0
    %378 = vmatprep.subr.mxu0 0.0
    %379 = vmatpush1.msra.mxu0 0.0
    %380 = vmatprep.subr.mxu0 0.0
    %381 = vmatpush1.msra.mxu0 0.0
    %382 = vmatprep.subr.mxu0 0.0
    %383 = vmatpush1.msra.mxu0 0.0
    %384 = vmatprep.subr.mxu0 0.0
    %385 = vmatpush1.msra.mxu0 0.0
    %386 = vmatprep.subr.mxu0 0.0
    %387 = vmatpush1.msra.mxu0 0.0
    %388 = vmatprep.subr.mxu0 0.0
    %389 = vmatpush1.msra.mxu0 0.0
    %390 = vmatprep.mubr.f32.mxu0 0.0
    %391 = vmatmul.mubr.f32.gmra.mrb[0].mxu0 %v324
    %v392 = vpop.f32.mrb[0].mxu0
    %v393 = vadd.f32 %v295, %v392
    %v394 = vpop.f32.mrb[0].mxu0
    %v395 = vadd.f32 %v299, %v394
    %396 = vdwg.mxu0
    %397 = vst [vmem:[#allocation5] sm:$0xff] %v393
    %398 = vst [vmem:[#allocation5 + $0x8] sm:$0xff] %v395
    // Predicated region
    $region22: #{tpu_custom_call.1} parent=1 // pred_check
      _
    $region23: #{tpu_custom_call.1} parent=1 // pred_check_branch
      %400 = sbr.rel (0) target = $region25
    $region24: #{tpu_custom_call.1} parent=1 // pred_region
      %s402 = ssub.s32 256, 256
      %403 = vsyncadd [#allocation4], %s402
      %s405 = sshll.u32 [#allocation5], 4
      %s406 = int_to_ptr.vmem [resolvable:$true] %s405
      %408 = dma.vmem_to_hbm [thread:$0]  %s406, 256, %s4, [#allocation4]
    $region25: #{tpu_custom_call.1} parent=1 // pred_fallthru
      _
    // Predicated region
    $region26: #{tpu_custom_call.1} parent=1 // pred_check
      _
    $region27: #{tpu_custom_call.1} parent=1 // pred_check_branch
      %410 = sbr.rel (0) target = $region29
    $region28: #{tpu_custom_call.1} parent=1 // pred_region
      %411 = dma.done [#allocation4], 256
    $region29: #{tpu_custom_call.1} parent=1 // pred_fallthru
      _
    %412 = vsyncpa [#allocation3], 1
    %413 = vsyncpa [#allocation4], 1

</llo_original>
